<compile_context>
chip_gen: v5e
topology: v5e:2x2
jax: 0.10.0
libtpu: 0.0.40
codegen_flags: <defaults>
</compile_context>

<pallas_src>
import functools

import jax
import jax.numpy as jnp
from jax.experimental import pallas as pl
from jax.experimental.pallas import tpu as pltpu

_LANE = 128


def _quant_act_kernel(w_ref, x_ref, thr_ref, o_ref, *,
                      n_thresholds, normalize, compute_dtype):
    """One column tile.

    w_ref   : SMEM (T+1,) int32 -- w_ref[0] = f(0); w_ref[k+1] = f(k+1) - f(k)
              where f(c) is the final class value for count c (identity or perm).
    x_ref   : VMEM (N, TB) f32
    thr_ref : VMEM (T, TB) f32, sorted ascending along axis 0
    o_ref   : VMEM (N, TB) f32
    """
    x = x_ref[...]                                        # (N, TB) f32

    # --- 1) per-column min/max rescale to [-0.5, 0.5] ------------------------
    # Exact reciprocal + zero-range guard: a constant column gives xn = -0.5, which
    # (like PyTorch's NaN column) quantizes to a constant class and z-scores to 0.
    mins = jnp.min(x, axis=0, keepdims=True)              # (1, TB)
    maxs = jnp.max(x, axis=0, keepdims=True)              # (1, TB)
    rng = maxs - mins
    inv_range = 1.0 / jnp.where(rng == 0.0, 1.0, rng)     # (1, TB): exact is free
    xn = (x - mins) * inv_range - 0.5                     # (N, TB) f32

    # --- 2+3) fused threshold count + randomize_classes ----------------------
    # Thresholds sorted ascending => indicator set {xn > thr[k]} is a prefix in k,
    # so  f(count) = w[0] + sum_{k < count} w[k+1]  is one where+add per threshold.
    cdtype = compute_dtype
    xnc = xn.astype(cdtype)
    thr = thr_ref[...].astype(cdtype)                     # (T, TB)
    zero = jnp.zeros((), cdtype)
    acc = jnp.zeros(xnc.shape, cdtype) + w_ref[0].astype(cdtype)
    for k in range(n_thresholds):                         # static unroll (T is small)
        wk = w_ref[k + 1].astype(cdtype)                  # SMEM scalar read
        acc = acc + jnp.where(xnc > thr[k:k + 1, :], wk, zero)

    out = acc.astype(jnp.float32)                         # small integers: exact

    # --- 4) normalize_data: z-score over axis 0, clip [-100, 100] ------------
    if normalize:
        n = out.shape[0]
        s = jnp.sum(out, axis=0, keepdims=True)
        ssq = jnp.sum(out * out, axis=0, keepdims=True)   # one-pass variance
        mean = s * (1.0 / n)
        var = jnp.maximum(ssq - mean * s, 0.0) * (1.0 / max(n - 1, 1))
        inv_std = 1.0 / (jnp.sqrt(var) + 1e-6)            # (1, TB): exact is free
        out = jnp.clip((out - mean) * inv_std, -100.0, 100.0)

    o_ref[...] = out


def _device_kind():
    try:
        return jax.devices()[0].device_kind.lower()
    except Exception:
        return ""


def _vmem_limit_bytes():
    """Scoped VMEM limit: half of physical (64 MiB on v5e/v6e, 32 MiB on v7x)."""
    try:
        phys = int(pltpu.get_tpu_info().vmem_capacity_bytes)
    except Exception:
        phys = 64 << 20
    return int(min(phys // 2, 64 << 20))


def _choose_block_cols(n_rows, n_cols, n_thresholds, vmem_budget, want_multi_tile):
    """Pick a lane-dense (multiple of 128) column-tile width that fits the budget."""
    cols_padded = pl.cdiv(n_cols, _LANE) * _LANE
    tb = min(512, cols_padded)                            # 512-wide ≈ HBM roofline sweet spot
    tb = pl.cdiv(tb, _LANE) * _LANE
    # Per column of tile width: double-buffered x + out blocks, double-buffered
    # thresholds block, and ~3 full-tile f32 elementwise temporaries (xn/acc/where).
    per_col_bytes = (2 * 2 * n_rows + 2 * n_thresholds + 3 * n_rows) * 4
    while tb > _LANE and tb * per_col_bytes > vmem_budget:
        tb -= _LANE
    # v7x megacore: ensure >= 2 column tiles so both TensorCores get work.
    if want_multi_tile:
        while tb > _LANE and pl.cdiv(cols_padded, tb) < 2:
            tb = pl.cdiv(max(_LANE, tb // 2), _LANE) * _LANE
    return tb


def quantization_activation(x, thresholds, perm, *, n_thresholds,
                            do_reorder, normalize=True, block_cols=None,
                            compute_dtype=None):
    """x: (N, B) f32; thresholds: (T, B) f32; perm: (T,) int class permutation."""
    N, B = x.shape
    T = n_thresholds

    kind = _device_kind()
    is_v7 = ("v7" in kind) or ("tpu7" in kind)
    if compute_dtype is None:
        # bf16 VPU exists on v6e/v7x (2x VALU throughput on the hot compare loop);
        # v5e has no bf16 VALU — keep f32 there (also the exact-parity path).
        compute_dtype = (jnp.bfloat16 if ("v6" in kind or is_v7) else jnp.float32)

    vmem_limit = _vmem_limit_bytes()
    TB = block_cols if block_cols is not None else _choose_block_cols(
        N, B, T, vmem_budget=int(vmem_limit * 0.75), want_multi_tile=is_v7)

    # Pad the column axis to a multiple of TB so every block is full and the output
    # is lane-dense. Columns are fully independent (all reductions over axis 0), so
    # edge-padded columns only produce throwaway output sliced off afterwards.
    Bp = pl.cdiv(B, TB) * TB
    if Bp != B:
        x_p = jnp.pad(x, ((0, 0), (0, Bp - B)), mode="edge")
        thr_p = jnp.pad(thresholds, ((0, 0), (0, Bp - B)), mode="edge")
    else:
        x_p, thr_p = x, thresholds

    # Counting is order-invariant: sort thresholds ascending per column so the
    # exceeded-threshold set is a prefix, then fuse count + randomize_classes into
    # a single weighted accumulation.  f(c) = perm[c] (c<T), f(T) = 0 when reordering;
    # f(c) = c otherwise.  Weights are small integers -> int32 scalar prefetch.
    thr_sorted = jnp.sort(thr_p, axis=0)
    if do_reorder:
        f_map = jnp.concatenate(
            [jnp.asarray(perm, jnp.int32).reshape(T), jnp.zeros((1,), jnp.int32)])
    else:
        f_map = jnp.arange(T + 1, dtype=jnp.int32)
    wvec = jnp.concatenate([f_map[:1], f_map[1:] - f_map[:-1]])      # (T+1,) int32

    kernel = functools.partial(
        _quant_act_kernel,
        n_thresholds=T,
        normalize=normalize,
        compute_dtype=compute_dtype,
    )
    out = pl.pallas_call(
        kernel,
        out_shape=jax.ShapeDtypeStruct((N, Bp), jnp.float32),
        grid_spec=pltpu.PrefetchScalarGridSpec(
            num_scalar_prefetch=1,                        # weight vector -> SMEM
            grid=(Bp // TB,),
            in_specs=[
                pl.BlockSpec((N, TB), lambda j, w: (0, j)),   # x tile
                pl.BlockSpec((T, TB), lambda j, w: (0, j)),   # sorted thresholds tile
            ],
            out_specs=pl.BlockSpec((N, TB), lambda j, w: (0, j)),
        ),
        compiler_params=pltpu.CompilerParams(
            dimension_semantics=("parallel",),            # independent column tiles
            vmem_limit_bytes=vmem_limit,
        ),
    )(wvec, x_p, thr_sorted)
    return out[:, :B] if Bp != B else out


def _reference(x, thresholds, perm, *, n_thresholds, do_reorder, normalize,
               compute_dtype):
    """Pure-JAX reference mirroring the module (same compare dtype as the kernel)."""
    mins = x.min(0, keepdims=True)
    maxs = x.max(0, keepdims=True)
    rng = maxs - mins
    inv = 1.0 / jnp.where(rng == 0.0, 1.0, rng)
    xn = (x - mins) * inv - 0.5
    cnt = jnp.sum(
        xn.astype(compute_dtype)[None, :, :] > thresholds.astype(compute_dtype)[:, None, :],
        axis=0).astype(jnp.float32)
    if do_reorder:
        f = jnp.concatenate([jnp.asarray(perm, jnp.float32).reshape(n_thresholds),
                             jnp.zeros((1,), jnp.float32)])
        cnt = f[cnt.astype(jnp.int32)]
    if normalize:
        mean = cnt.mean(0, keepdims=True)
        std = cnt.std(0, ddof=1, keepdims=True) + 1e-6
        cnt = jnp.clip((cnt - mean) / std, -100.0, 100.0)
    return cnt


if __name__ == "__main__":
    n_thresholds = 8
    reorder_p = 0.5
    normalize = True
    N, B = 16, 32                                         # (samples/seq, batch columns)

    key = jax.random.PRNGKey(0)
    k_param, k_x, k_thr, k_perm, k_reorder = jax.random.split(key, 5)

    # Module parameter (torch.randn(n_thresholds)) — unused in forward, init for parity.
    _param_thresholds = jax.random.normal(k_param, (n_thresholds,), dtype=jnp.float32)

    # Input.
    x = jax.random.normal(k_x, (N, B), dtype=jnp.float32)

    # Forward-time randomness (deterministic here via PRNGKey(0)):
    #   thresholds = torch.rand((T, B)) - 0.5
    thresholds = jax.random.uniform(k_thr, (n_thresholds, B), dtype=jnp.float32) - 0.5
    #   random_classes = torch.randperm(T)
    perm = jax.random.permutation(k_perm, n_thresholds)
    #   random.random() < reorder_p  (host-side static decision, as in PyTorch)
    do_reorder = bool(float(jax.random.uniform(k_reorder, ())) < reorder_p)

    out = quantization_activation(
        x, thresholds, perm,
        n_thresholds=n_thresholds,
        do_reorder=do_reorder,
        normalize=normalize,
    )
    jax.block_until_ready(out)
    assert out.shape == (N, B) and out.dtype == jnp.float32
    assert bool(jnp.all(jnp.isfinite(out)))

    # Numeric check against a pure-JAX reference using the same compare dtype.
    kind = _device_kind()
    cdt = jnp.bfloat16 if ("v6" in kind or "v7" in kind or "tpu7" in kind) else jnp.float32
    ref = _reference(x, thresholds, perm, n_thresholds=n_thresholds,
                     do_reorder=do_reorder, normalize=normalize, compute_dtype=cdt)
    assert bool(jnp.allclose(out, ref, rtol=2e-3, atol=2e-3))
    print("KERNEL_OK")
</pallas_src>

<mosaic_0001>
module attributes {stable_mosaic.version = 11 : i64} {
  func.func @_quant_act_kernel(%arg0: i32, %arg1: memref<9xi32, #tpu.memory_space<smem>>, %arg2: memref<16x128xf32, #tpu.memory_space<vmem>>, %arg3: memref<8x128xf32, #tpu.memory_space<vmem>>, %arg4: memref<16x128xf32, #tpu.memory_space<vmem>>) attributes {dimension_semantics = [#tpu.dimension_semantics<parallel>], iteration_bounds = array<i64: 1>, scalar_prefetch = 1 : i64, scratch_operands = 0 : i64, tpu.core_type = #tpu.core_type<tc>, window_params = [{transform_indices = @transform_0, window_bounds = array<i64: 16, 128>}, {transform_indices = @transform_1, window_bounds = array<i64: 8, 128>}, {transform_indices = @transform_2, window_bounds = array<i64: 16, 128>}]} {
    %c0 = arith.constant 0 : index
    %c0_0 = arith.constant 0 : index
    %0 = vector.load %arg2[%c0, %c0_0] : memref<16x128xf32, #tpu.memory_space<vmem>>, vector<16x128xf32>
    %cst = arith.constant dense<0x7F800000> : vector<128xf32>
    %1 = vector.multi_reduction <minimumf>, %0, %cst [0] : vector<16x128xf32> to vector<128xf32>
    %2 = vector.shape_cast %1 : vector<128xf32> to vector<1x128xf32>
    %cst_1 = arith.constant dense<0xFF800000> : vector<128xf32>
    %3 = vector.multi_reduction <maximumf>, %0, %cst_1 [0] : vector<16x128xf32> to vector<128xf32>
    %4 = vector.shape_cast %3 : vector<128xf32> to vector<1x128xf32>
    %5 = arith.subf %4, %2 : vector<1x128xf32>
    %cst_2 = arith.constant 0.000000e+00 : f32
    %6 = vector.broadcast %cst_2 : f32 to vector<1x128xf32>
    %7 = arith.cmpf oeq, %5, %6 : vector<1x128xf32>
    %cst_3 = arith.constant 1.000000e+00 : f32
    %8 = vector.broadcast %cst_3 : f32 to vector<1x128xf32>
    %9 = arith.select %7, %8, %5 : vector<1x128xi1>, vector<1x128xf32>
    %cst_4 = arith.constant 1.000000e+00 : f32
    %10 = vector.broadcast %cst_4 : f32 to vector<1x128xf32>
    %11 = arith.divf %10, %9 : vector<1x128xf32>
    %12 = vector.broadcast %2 : vector<1x128xf32> to vector<16x128xf32>
    %13 = arith.subf %0, %12 : vector<16x128xf32>
    %14 = vector.broadcast %11 : vector<1x128xf32> to vector<16x128xf32>
    %15 = arith.mulf %13, %14 : vector<16x128xf32>
    %cst_5 = arith.constant 5.000000e-01 : f32
    %16 = vector.broadcast %cst_5 : f32 to vector<16x128xf32>
    %17 = arith.subf %15, %16 : vector<16x128xf32>
    %c0_6 = arith.constant 0 : index
    %c0_7 = arith.constant 0 : index
    %18 = vector.load %arg3[%c0_6, %c0_7] : memref<8x128xf32, #tpu.memory_space<vmem>>, vector<8x128xf32>
    %cst_8 = arith.constant 0.000000e+00 : f32
    %19 = vector.broadcast %cst_8 : f32 to vector<16x128xf32>
    %c0_9 = arith.constant 0 : index
    %20 = memref.load %arg1[%c0_9] : memref<9xi32, #tpu.memory_space<smem>>
    %21 = arith.sitofp %20 : i32 to f32
    %22 = vector.broadcast %21 : f32 to vector<16x128xf32>
    %23 = arith.addf %19, %22 : vector<16x128xf32>
    %c1 = arith.constant 1 : index
    %24 = memref.load %arg1[%c1] : memref<9xi32, #tpu.memory_space<smem>>
    %25 = arith.sitofp %24 : i32 to f32
    %26 = vector.extract_strided_slice %18 {offsets = [0, 0], sizes = [1, 128], strides = [1, 1]} : vector<8x128xf32> to vector<1x128xf32>
    %27 = vector.broadcast %26 : vector<1x128xf32> to vector<16x128xf32>
    %28 = arith.cmpf ogt, %17, %27 : vector<16x128xf32>
    %cst_10 = arith.constant 0.000000e+00 : f32
    %29 = vector.broadcast %25 : f32 to vector<16x128xf32>
    %30 = vector.broadcast %cst_10 : f32 to vector<16x128xf32>
    %31 = arith.select %28, %29, %30 : vector<16x128xi1>, vector<16x128xf32>
    %32 = arith.addf %23, %31 : vector<16x128xf32>
    %c2 = arith.constant 2 : index
    %33 = memref.load %arg1[%c2] : memref<9xi32, #tpu.memory_space<smem>>
    %34 = arith.sitofp %33 : i32 to f32
    %35 = vector.extract_strided_slice %18 {offsets = [1, 0], sizes = [1, 128], strides = [1, 1]} : vector<8x128xf32> to vector<1x128xf32>
    %36 = vector.broadcast %35 : vector<1x128xf32> to vector<16x128xf32>
    %37 = arith.cmpf ogt, %17, %36 : vector<16x128xf32>
    %cst_11 = arith.constant 0.000000e+00 : f32
    %38 = vector.broadcast %34 : f32 to vector<16x128xf32>
    %39 = vector.broadcast %cst_11 : f32 to vector<16x128xf32>
    %40 = arith.select %37, %38, %39 : vector<16x128xi1>, vector<16x128xf32>
    %41 = arith.addf %32, %40 : vector<16x128xf32>
    %c3 = arith.constant 3 : index
    %42 = memref.load %arg1[%c3] : memref<9xi32, #tpu.memory_space<smem>>
    %43 = arith.sitofp %42 : i32 to f32
    %44 = vector.extract_strided_slice %18 {offsets = [2, 0], sizes = [1, 128], strides = [1, 1]} : vector<8x128xf32> to vector<1x128xf32>
    %45 = vector.broadcast %44 : vector<1x128xf32> to vector<16x128xf32>
    %46 = arith.cmpf ogt, %17, %45 : vector<16x128xf32>
    %cst_12 = arith.constant 0.000000e+00 : f32
    %47 = vector.broadcast %43 : f32 to vector<16x128xf32>
    %48 = vector.broadcast %cst_12 : f32 to vector<16x128xf32>
    %49 = arith.select %46, %47, %48 : vector<16x128xi1>, vector<16x128xf32>
    %50 = arith.addf %41, %49 : vector<16x128xf32>
    %c4 = arith.constant 4 : index
    %51 = memref.load %arg1[%c4] : memref<9xi32, #tpu.memory_space<smem>>
    %52 = arith.sitofp %51 : i32 to f32
    %53 = vector.extract_strided_slice %18 {offsets = [3, 0], sizes = [1, 128], strides = [1, 1]} : vector<8x128xf32> to vector<1x128xf32>
    %54 = vector.broadcast %53 : vector<1x128xf32> to vector<16x128xf32>
    %55 = arith.cmpf ogt, %17, %54 : vector<16x128xf32>
    %cst_13 = arith.constant 0.000000e+00 : f32
    %56 = vector.broadcast %52 : f32 to vector<16x128xf32>
    %57 = vector.broadcast %cst_13 : f32 to vector<16x128xf32>
    %58 = arith.select %55, %56, %57 : vector<16x128xi1>, vector<16x128xf32>
    %59 = arith.addf %50, %58 : vector<16x128xf32>
    %c5 = arith.constant 5 : index
    %60 = memref.load %arg1[%c5] : memref<9xi32, #tpu.memory_space<smem>>
    %61 = arith.sitofp %60 : i32 to f32
    %62 = vector.extract_strided_slice %18 {offsets = [4, 0], sizes = [1, 128], strides = [1, 1]} : vector<8x128xf32> to vector<1x128xf32>
    %63 = vector.broadcast %62 : vector<1x128xf32> to vector<16x128xf32>
    %64 = arith.cmpf ogt, %17, %63 : vector<16x128xf32>
    %cst_14 = arith.constant 0.000000e+00 : f32
    %65 = vector.broadcast %61 : f32 to vector<16x128xf32>
    %66 = vector.broadcast %cst_14 : f32 to vector<16x128xf32>
    %67 = arith.select %64, %65, %66 : vector<16x128xi1>, vector<16x128xf32>
    %68 = arith.addf %59, %67 : vector<16x128xf32>
    %c6 = arith.constant 6 : index
    %69 = memref.load %arg1[%c6] : memref<9xi32, #tpu.memory_space<smem>>
    %70 = arith.sitofp %69 : i32 to f32
    %71 = vector.extract_strided_slice %18 {offsets = [5, 0], sizes = [1, 128], strides = [1, 1]} : vector<8x128xf32> to vector<1x128xf32>
    %72 = vector.broadcast %71 : vector<1x128xf32> to vector<16x128xf32>
    %73 = arith.cmpf ogt, %17, %72 : vector<16x128xf32>
    %cst_15 = arith.constant 0.000000e+00 : f32
    %74 = vector.broadcast %70 : f32 to vector<16x128xf32>
    %75 = vector.broadcast %cst_15 : f32 to vector<16x128xf32>
    %76 = arith.select %73, %74, %75 : vector<16x128xi1>, vector<16x128xf32>
    %77 = arith.addf %68, %76 : vector<16x128xf32>
    %c7 = arith.constant 7 : index
    %78 = memref.load %arg1[%c7] : memref<9xi32, #tpu.memory_space<smem>>
    %79 = arith.sitofp %78 : i32 to f32
    %80 = vector.extract_strided_slice %18 {offsets = [6, 0], sizes = [1, 128], strides = [1, 1]} : vector<8x128xf32> to vector<1x128xf32>
    %81 = vector.broadcast %80 : vector<1x128xf32> to vector<16x128xf32>
    %82 = arith.cmpf ogt, %17, %81 : vector<16x128xf32>
    %cst_16 = arith.constant 0.000000e+00 : f32
    %83 = vector.broadcast %79 : f32 to vector<16x128xf32>
    %84 = vector.broadcast %cst_16 : f32 to vector<16x128xf32>
    %85 = arith.select %82, %83, %84 : vector<16x128xi1>, vector<16x128xf32>
    %86 = arith.addf %77, %85 : vector<16x128xf32>
    %c8 = arith.constant 8 : index
    %87 = memref.load %arg1[%c8] : memref<9xi32, #tpu.memory_space<smem>>
    %88 = arith.sitofp %87 : i32 to f32
    %89 = vector.extract_strided_slice %18 {offsets = [7, 0], sizes = [1, 128], strides = [1, 1]} : vector<8x128xf32> to vector<1x128xf32>
    %90 = vector.broadcast %89 : vector<1x128xf32> to vector<16x128xf32>
    %91 = arith.cmpf ogt, %17, %90 : vector<16x128xf32>
    %cst_17 = arith.constant 0.000000e+00 : f32
    %92 = vector.broadcast %88 : f32 to vector<16x128xf32>
    %93 = vector.broadcast %cst_17 : f32 to vector<16x128xf32>
    %94 = arith.select %91, %92, %93 : vector<16x128xi1>, vector<16x128xf32>
    %95 = arith.addf %86, %94 : vector<16x128xf32>
    %cst_18 = arith.constant dense<0.000000e+00> : vector<128xf32>
    %96 = vector.multi_reduction <add>, %95, %cst_18 [0] : vector<16x128xf32> to vector<128xf32>
    %97 = vector.shape_cast %96 : vector<128xf32> to vector<1x128xf32>
    %98 = arith.mulf %95, %95 : vector<16x128xf32>
    %cst_19 = arith.constant dense<0.000000e+00> : vector<128xf32>
    %99 = vector.multi_reduction <add>, %98, %cst_19 [0] : vector<16x128xf32> to vector<128xf32>
    %100 = vector.shape_cast %99 : vector<128xf32> to vector<1x128xf32>
    %cst_20 = arith.constant 6.250000e-02 : f32
    %101 = vector.broadcast %cst_20 : f32 to vector<1x128xf32>
    %102 = arith.mulf %97, %101 : vector<1x128xf32>
    %103 = arith.mulf %102, %97 : vector<1x128xf32>
    %104 = arith.subf %100, %103 : vector<1x128xf32>
    %cst_21 = arith.constant 0.000000e+00 : f32
    %105 = vector.broadcast %cst_21 : f32 to vector<1x128xf32>
    %106 = arith.maximumf %104, %105 : vector<1x128xf32>
    %cst_22 = arith.constant 0.0666666701 : f32
    %107 = vector.broadcast %cst_22 : f32 to vector<1x128xf32>
    %108 = arith.mulf %106, %107 : vector<1x128xf32>
    %109 = math.sqrt %108 : vector<1x128xf32>
    %cst_23 = arith.constant 9.99999997E-7 : f32
    %110 = vector.broadcast %cst_23 : f32 to vector<1x128xf32>
    %111 = arith.addf %109, %110 : vector<1x128xf32>
    %cst_24 = arith.constant 1.000000e+00 : f32
    %112 = vector.broadcast %cst_24 : f32 to vector<1x128xf32>
    %113 = arith.divf %112, %111 : vector<1x128xf32>
    %114 = vector.broadcast %102 : vector<1x128xf32> to vector<16x128xf32>
    %115 = arith.subf %95, %114 : vector<16x128xf32>
    %116 = vector.broadcast %113 : vector<1x128xf32> to vector<16x128xf32>
    %117 = arith.mulf %115, %116 : vector<16x128xf32>
    %cst_25 = arith.constant -1.000000e+02 : f32
    %cst_26 = arith.constant 1.000000e+02 : f32
    %118 = vector.broadcast %cst_25 : f32 to vector<16x128xf32>
    %119 = arith.maximumf %118, %117 : vector<16x128xf32>
    %120 = vector.broadcast %cst_26 : f32 to vector<16x128xf32>
    %121 = arith.minimumf %120, %119 : vector<16x128xf32>
    %c0_27 = arith.constant 0 : index
    %c0_28 = arith.constant 0 : index
    %122 = vector.load %arg4[%c0_27, %c0_28] : memref<16x128xf32, #tpu.memory_space<vmem>>, vector<16x128xf32>
    tpu.vector_store %arg4[%c0_27, %c0_28], %121 {strides = array<i32>} : memref<16x128xf32, #tpu.memory_space<vmem>>, vector<16x128xf32>,
    return
  }
  func.func @transform_0(%arg0: i32, %arg1: memref<9xi32, #tpu.memory_space<smem>>) -> (i32, i32) {
    %c0_i32 = arith.constant 0 : i32
    %c0_i32_0 = arith.constant 0 : i32
    return %c0_i32, %arg0 : i32, i32
  }
  func.func @transform_1(%arg0: i32, %arg1: memref<9xi32, #tpu.memory_space<smem>>) -> (i32, i32) {
    %c0_i32 = arith.constant 0 : i32
    %c0_i32_0 = arith.constant 0 : i32
    return %c0_i32, %arg0 : i32, i32
  }
  func.func @transform_2(%arg0: i32, %arg1: memref<9xi32, #tpu.memory_space<smem>>) -> (i32, i32) {
    %c0_i32 = arith.constant 0 : i32
    %c0_i32_0 = arith.constant 0 : i32
    return %c0_i32, %arg0 : i32, i32
  }
}

</mosaic_0001>

<llo_original>
// kernel: tpu_custom_call.1
$region0: #{tpu_custom_call.1}
  #allocation0 [shape = 'u32[]', space=smem, size = 0x4, offset = 0x4, fixed_abs, tag = 'smem constant byte address 0x4 - core index']
  #allocation1 [shape = 'u32[72,128]{1,0:T(1,128)}', space=vmem, size = 0x9000, scoped, tag = 'internal scratch']
  #allocation2 [shape = 's32[1]{0}', space=sflag, size = 0x4, scoped, tag = 'scoped memory for tpu_custom_call.1']
  #allocation3 [shape = 'u8[512]{0}', space=smem, size = 0x200, scoped, tag = 'prefetched SMEM operand 0']
  %s0 = inlined_call_operand.hbm [shape: s32[9], index: 0, kind: input, shape index: {}]
  %s1 = inlined_call_operand.hbm [shape: f32[16,128], index: 1, kind: input, shape index: {}]
  %s2 = inlined_call_operand.hbm [shape: f32[8,128], index: 2, kind: input, shape index: {}]
  %s3 = inlined_call_operand.hbm [shape: f32[16,128], index: 3, kind: output, shape index: {}]
  %s4 = sld [smem:[#allocation0]]
  $region26: #{tpu_custom_call.1} parent=0
    _
  %s6 = ssub.s32 1, %s4
  %s7 = scalar_select 0, %s6, %s4
  %s9 = sshll.u32 %s0, 4
  %s10 = int_to_ptr.hbm [resolvable:$true] %s9
  %12 = dma.hbm_to_smem %s10, 16, [#allocation3], [#allocation2]
  %14 = dma.done [#allocation2], 16
  %15 = sfence
  $region1: #{tpu_custom_call.1} parent=0
    #allocation4 [shape = 'u8[8192]{0}', space=vmem, size = 0x2000, scoped, tag = 'input window, operand 1, single buffered']
    #allocation5 [shape = 's32[1]{0}', space=sflag, size = 0x4, scoped, tag = 'scoped memory for tpu_custom_call.1']
    #allocation6 [shape = 's32[1]{0}', space=sflag, size = 0x4, scoped, tag = 'scoped memory for tpu_custom_call.1']
    #allocation7 [shape = 'u8[4096]{0}', space=vmem, size = 0x1000, scoped, tag = 'input window, operand 2, single buffered']
    #allocation8 [shape = 's32[1]{0}', space=sflag, size = 0x4, scoped, tag = 'scoped memory for tpu_custom_call.1']
    #allocation9 [shape = 'u8[8192]{0}', space=vmem, size = 0x2000, scoped, tag = 'output window, operand 0, single buffered']
    %16 = vsyncpa [#allocation5], 0
    %17 = vsyncpa [#allocation8], 0
    %18 = vsyncpa [#allocation6], 0
    // Predicated region
    $region2: #{tpu_custom_call.1} parent=1 // pred_check
      _
    $region3: #{tpu_custom_call.1} parent=1 // pred_check_branch
      %20 = sbr.rel (0) target = $region5
    $region4: #{tpu_custom_call.1} parent=1 // pred_region
      %22 = vsyncadd [#allocation5], 0
      %s23 = sshll.u32 %s1, 4
      %s24 = int_to_ptr.hbm [resolvable:$true] %s23
      %s25 = sshll.u32 [#allocation4], 4
      %s26 = int_to_ptr.vmem [resolvable:$true] %s25
      %31 = dma.hbm_to_vmem [thread:$0]  %s24, 256, %s26, [#allocation5], 128, 128, 8
    $region5: #{tpu_custom_call.1} parent=1 // pred_fallthru
      _
    // Predicated region
    $region6: #{tpu_custom_call.1} parent=1 // pred_check
      _
    $region7: #{tpu_custom_call.1} parent=1 // pred_check_branch
      %33 = sbr.rel (0) target = $region9
    $region8: #{tpu_custom_call.1} parent=1 // pred_region
      %35 = vsyncadd [#allocation8], 0
      %s37 = sshll.u32 %s2, 4
      %s38 = int_to_ptr.hbm [resolvable:$true] %s37
      %s39 = sshll.u32 [#allocation7], 4
      %s40 = int_to_ptr.vmem [resolvable:$true] %s39
      %42 = dma.hbm_to_vmem [thread:$0]  %s38, 128, %s40, [#allocation8]
    $region9: #{tpu_custom_call.1} parent=1 // pred_fallthru
      _
    // Predicated region
    $region10: #{tpu_custom_call.1} parent=1 // pred_check
      _
    $region11: #{tpu_custom_call.1} parent=1 // pred_check_branch
      %44 = sbr.rel (0) target = $region13
    $region12: #{tpu_custom_call.1} parent=1 // pred_region
      %46 = dma.done [#allocation5], 256
    $region13: #{tpu_custom_call.1} parent=1 // pred_fallthru
      _
    // Predicated region
    $region14: #{tpu_custom_call.1} parent=1 // pred_check
      _
    $region15: #{tpu_custom_call.1} parent=1 // pred_check_branch
      %48 = sbr.rel (0) target = $region17
    $region16: #{tpu_custom_call.1} parent=1 // pred_region
      %50 = dma.done [#allocation8], 128
    $region17: #{tpu_custom_call.1} parent=1 // pred_fallthru
      _
    %v51 = vld [vmem:[#allocation4] sm:$0xff]
    %v52 = vld [vmem:[#allocation4 + $0x8] sm:$0xff]
    %v53 = vmin.f32 %v51, %v52
    %v54 = vrot.slane %v53, 4
    %v55 = vmin.f32 %v53, %v54
    %v56 = vrot.slane %v55, 2
    %v57 = vmin.f32 %v55, %v56
    %v58 = vrot.slane %v57, 1
    %v59 = vmin.f32 %v57, %v58
    %v60 = vmax.f32 %v51, %v52
    %v61 = vrot.slane %v60, 4
    %v62 = vmax.f32 %v60, %v61
    %v63 = vrot.slane %v62, 2
    %v64 = vmax.f32 %v62, %v63
    %v65 = vrot.slane %v64, 1
    %v66 = vmax.f32 %v64, %v65
    %v67 = vsub.f32 %v66, %v59
    %vm68 = vcmp.eq.f32.partialorder %v67, 0.0
    %v69 = vsel %vm68, 1.0, %v67
    %v70 = vrcp.pop %v69
    %v71 = vmul.f32 %v69, %v70
    %v72 = vsub.f32 1.0, %v71
    %v73 = vmul.f32 %v70, %v72
    %v74 = vadd.f32 %v70, %v73
    %vm75 = vweird.f32 %v69
    %vm76 = vweird.f32 %v70
    %vm77 = vmor %vm75, %vm76
    %v78 = vsel %vm77, %v70, %v74
    %v79 = vand.u32 2147483647, %v69
    %vm80 = vcmp.eq.f32.partialorder %v79, 8.507059e+37
    %v81 = vand.u32 %v69, 2147483648
    %v82 = vor.u32 1.1754944e-38, %v81
    %v83 = vsel %vm80, %v82, %v78
    %v84 = vmul.f32 1.0, %v83
    %v85 = vsub.f32 %v51, %v59
    %v86 = vsub.f32 %v52, %v59
    %v87 = vmul.f32 %v85, %v84
    %v88 = vmul.f32 %v86, %v84
    %v89 = vsub.f32 %v87, 0.5
    %v90 = vsub.f32 %v88, 0.5
    %v91 = vld [vmem:[#allocation7] sm:$0xff]
    %s92 = sld [smem:[#allocation3]]
    %s93 = scvt.s32.f32 %s92
    %v94 = vstv %s93
    %v95 = vadd.f32 %v94, 0.0
    %s96 = sld [smem:[#allocation3 + $0x1]]
    %s97 = scvt.s32.f32 %s96
    %v98 = vperm.slane %v91, 0
    %vm99 = vcmp.gt.f32.partialorder %v89, %v98
    %vm100 = vcmp.gt.f32.partialorder %v90, %v98
    %v101 = vstv %s97
    %v102 = vsel %vm99, %v101, 0.0
    %v103 = vsel %vm100, %v101, 0.0
    %v104 = vadd.f32 %v95, %v102
    %v105 = vadd.f32 %v95, %v103
    %s106 = sld [smem:[#allocation3 + $0x2]]
    %s107 = scvt.s32.f32 %s106
    %v108 = vperm.slane %v91, 1
    %vm109 = vcmp.gt.f32.partialorder %v89, %v108
    %vm110 = vcmp.gt.f32.partialorder %v90, %v108
    %v111 = vstv %s107
    %v112 = vsel %vm109, %v111, 0.0
    %v113 = vsel %vm110, %v111, 0.0
    %v114 = vadd.f32 %v104, %v112
    %v115 = vadd.f32 %v105, %v113
    %s116 = sld [smem:[#allocation3 + $0x3]]
    %s117 = scvt.s32.f32 %s116
    %v118 = vperm.slane %v91, 2
    %vm119 = vcmp.gt.f32.partialorder %v89, %v118
    %vm120 = vcmp.gt.f32.partialorder %v90, %v118
    %v121 = vstv %s117
    %v122 = vsel %vm119, %v121, 0.0
    %v123 = vsel %vm120, %v121, 0.0
    %v124 = vadd.f32 %v114, %v122
    %v125 = vadd.f32 %v115, %v123
    %s126 = sld [smem:[#allocation3 + $0x4]]
    %s127 = scvt.s32.f32 %s126
    %v128 = vperm.slane %v91, 3
    %vm129 = vcmp.gt.f32.partialorder %v89, %v128
    %vm130 = vcmp.gt.f32.partialorder %v90, %v128
    %v131 = vstv %s127
    %v132 = vsel %vm129, %v131, 0.0
    %v133 = vsel %vm130, %v131, 0.0
    %v134 = vadd.f32 %v124, %v132
    %v135 = vadd.f32 %v125, %v133
    %s136 = sld [smem:[#allocation3 + $0x5]]
    %s137 = scvt.s32.f32 %s136
    %v138 = vperm.slane %v91, 4
    %vm139 = vcmp.gt.f32.partialorder %v89, %v138
    %vm140 = vcmp.gt.f32.partialorder %v90, %v138
    %v141 = vstv %s137
    %v142 = vsel %vm139, %v141, 0.0
    %v143 = vsel %vm140, %v141, 0.0
    %v144 = vadd.f32 %v134, %v142
    %v145 = vadd.f32 %v135, %v143
    %s146 = sld [smem:[#allocation3 + $0x6]]
    %s147 = scvt.s32.f32 %s146
    %v148 = vperm.slane %v91, 5
    %vm149 = vcmp.gt.f32.partialorder %v89, %v148
    %vm150 = vcmp.gt.f32.partialorder %v90, %v148
    %v151 = vstv %s147
    %v152 = vsel %vm149, %v151, 0.0
    %v153 = vsel %vm150, %v151, 0.0
    %v154 = vadd.f32 %v144, %v152
    %v155 = vadd.f32 %v145, %v153
    %s156 = sld [smem:[#allocation3 + $0x7]]
    %s157 = scvt.s32.f32 %s156
    %v158 = vperm.slane %v91, 6
    %vm159 = vcmp.gt.f32.partialorder %v89, %v158
    %vm160 = vcmp.gt.f32.partialorder %v90, %v158
    %v161 = vstv %s157
    %v162 = vsel %vm159, %v161, 0.0
    %v163 = vsel %vm160, %v161, 0.0
    %v164 = vadd.f32 %v154, %v162
    %v165 = vadd.f32 %v155, %v163
    %s166 = sld [smem:[#allocation3 + $0x8]]
    %s167 = scvt.s32.f32 %s166
    %v168 = vperm.slane %v91, 7
    %vm169 = vcmp.gt.f32.partialorder %v89, %v168
    %vm170 = vcmp.gt.f32.partialorder %v90, %v168
    %v171 = vstv %s167
    %v172 = vsel %vm169, %v171, 0.0
    %v173 = vsel %vm170, %v171, 0.0
    %v174 = vadd.f32 %v164, %v172
    %v175 = vadd.f32 %v165, %v173
    %v176 = vadd.f32 %v174, %v175
    %v177 = vrot.slane %v176, 4
    %v178 = vadd.f32 %v176, %v177
    %v179 = vrot.slane %v178, 2
    %v180 = vadd.f32 %v178, %v179
    %v181 = vrot.slane %v180, 1
    %v182 = vadd.f32 %v180, %v181
    %v183 = vmul.f32 %v174, %v174
    %v184 = vmul.f32 %v175, %v175
    %v185 = vadd.f32 %v183, %v184
    %v186 = vrot.slane %v185, 4
    %v187 = vadd.f32 %v185, %v186
    %v188 = vrot.slane %v187, 2
    %v189 = vadd.f32 %v187, %v188
    %v190 = vrot.slane %v189, 1
    %v191 = vadd.f32 %v189, %v190
    %v192 = vmul.f32 %v182, 0.0625
    %v193 = vmul.f32 %v192, %v182
    %v194 = vsub.f32 %v191, %v193
    %v195 = vmax.f32 %v194, 0.0
    %v196 = vmul.f32 %v195, 0.06666667
    %v197 = vrsqrt.pop %v196
    %v198 = vmul.f32 %v197, %v196
    %v199 = vmul.f32 %v198, %v197
    %v200 = vmul.f32 0.5, %v199
    %v201 = vsub.f32 1.5, %v200
    %v202 = vmul.f32 %v197, %v201
    %v203 = vmul.f32 %v196, %v202
    %vm204 = vcmp.eq.f32.partialorder %v196, inf
    %v205 = vsel %vm204, %v196, %v203
    %vm206 = vcmp.eq.f32.partialorder %v196, 0.0
    %v207 = vand.u32 %v196, 2147483648
    %v208 = vsel %vm206, %v207, %v205
    %v209 = vadd.f32 %v208, 1e-06
    %v210 = vrcp.pop %v209
    %v211 = vmul.f32 %v209, %v210
    %v212 = vsub.f32 1.0, %v211
    %v213 = vmul.f32 %v210, %v212
    %v214 = vadd.f32 %v210, %v213
    %vm215 = vweird.f32 %v209
    %vm216 = vweird.f32 %v210
    %vm217 = vmor %vm215, %vm216
    %v218 = vsel %vm217, %v210, %v214
    %v219 = vand.u32 2147483647, %v209
    %vm220 = vcmp.eq.f32.partialorder %v219, 8.507059e+37
    %v221 = vand.u32 %v209, 2147483648
    %v222 = vor.u32 1.1754944e-38, %v221
    %v223 = vsel %vm220, %v222, %v218
    %v224 = vmul.f32 1.0, %v223
    %v225 = vsub.f32 %v174, %v192
    %v226 = vsub.f32 %v175, %v192
    %v227 = vmul.f32 %v225, %v224
    %v228 = vmul.f32 %v226, %v224
    %v229 = vmax.f32 %v227, -100.0
    %v230 = vmax.f32 %v228, -100.0
    %v231 = vmin.f32 %v229, 100.0
    %v232 = vmin.f32 %v230, 100.0
    %233 = vst [vmem:[#allocation9] sm:$0xff] %v231
    %234 = vst [vmem:[#allocation9 + $0x8] sm:$0xff] %v232
    // Predicated region
    $region18: #{tpu_custom_call.1} parent=1 // pred_check
      _
    $region19: #{tpu_custom_call.1} parent=1 // pred_check_branch
      %236 = sbr.rel (0) target = $region21
    $region20: #{tpu_custom_call.1} parent=1 // pred_region
      %238 = vsyncadd [#allocation6], 0
      %s239 = sshll.u32 [#allocation9], 4
      %s240 = int_to_ptr.vmem [resolvable:$true] %s239
      %s241 = sshll.u32 %s3, 4
      %s242 = int_to_ptr.hbm [resolvable:$true] %s241
      %247 = dma.vmem_to_hbm [thread:$0]  %s240, 256, %s242, [#allocation6], 128, 128, 8
    $region21: #{tpu_custom_call.1} parent=1 // pred_fallthru
      _
    // Predicated region
    $region22: #{tpu_custom_call.1} parent=1 // pred_check
      _
    $region23: #{tpu_custom_call.1} parent=1 // pred_check_branch
      %249 = sbr.rel (0) target = $region25
    $region24: #{tpu_custom_call.1} parent=1 // pred_region
      %251 = dma.done [#allocation6], 256
    $region25: #{tpu_custom_call.1} parent=1 // pred_fallthru
      _
    %252 = vsyncpa [#allocation5], 1
    %253 = vsyncpa [#allocation8], 1
    %254 = vsyncpa [#allocation6], 1

</llo_original>
